<compile_context>
chip_gen: v7x
topology: tpu7x:2x2x1
jax: 0.10.0
libtpu: 0.0.40
codegen_flags: <defaults>
</compile_context>

<pallas_src>
import math

import jax
import jax.numpy as jnp
from jax import lax
from jax.experimental import pallas as pl
from jax.experimental.pallas import tpu as pltpu

_INV_SQRT2 = 1.0 / math.sqrt(2.0)


def _gelu_exact(x):
    # nn.GELU() default (approximate='none'): 0.5 * x * (1 + erf(x / sqrt(2)))
    return 0.5 * x * (1.0 + lax.erf(x * _INV_SQRT2))


def _gelu_tanh(x):
    # Opt-in tanh approximation (moves work VPU -> EUP; useful on v5e only).
    c = 0.7978845608028654  # sqrt(2/pi)
    return 0.5 * x * (1.0 + jnp.tanh(c * (x + 0.044715 * x * x * x)))


def _round_up(v, m):
    return ((v + m - 1) // m) * m


def _cdiv(a, b):
    return (a + b - 1) // b


def _tpu_vmem_capacity():
    try:
        cap = getattr(pltpu.get_tpu_info(), "vmem_capacity_bytes", None)
        if cap:
            return int(cap)
    except Exception:
        pass
    return 128 << 20  # v5e/v6e physical; v7x reports 64 MiB when query works


def _pad2(a, rows, cols, dtype):
    """Pad/cast a 2-D array.  No-op (no copy) when already aligned & typed."""
    r, c = a.shape
    if (r, c) == (rows, cols):
        return a if a.dtype == dtype else a.astype(dtype)
    return jnp.zeros((rows, cols), dtype).at[:r, :c].set(a.astype(dtype))


def prepare_weights(w1, b1, w2, b2, compute_dtype=jnp.bfloat16):
    """Pad/cast FFN params once, outside the hot path.  feed_forward passes
    already-aligned params straight through without re-materializing copies."""
    H, I = w1.shape
    Hp, Ip = _round_up(H, 128), _round_up(I, 128)
    return (_pad2(w1, Hp, Ip, compute_dtype),
            _pad2(b1.reshape(1, -1), 1, Ip, jnp.float32),
            _pad2(w2, Ip, Hp, compute_dtype),
            _pad2(b2.reshape(1, -1), 1, Hp, jnp.float32))


def _make_kernels(gelu):
    def resident_kernel(x_ref, w1_ref, b1_ref, w2_ref, b2_ref, o_ref):
        # x_ref: (tm, Hp) bf16, w1_ref: (Hp, Ip) bf16, b1_ref: (1, Ip) f32
        # w2_ref: (Ip, Hp) bf16, b2_ref: (1, Hp) f32, o_ref: (tm, Hp)
        h = jnp.dot(x_ref[...], w1_ref[...], preferred_element_type=jnp.float32)
        h = gelu(h + b1_ref[...])
        y = jnp.dot(h.astype(w2_ref.dtype), w2_ref[...],
                    preferred_element_type=jnp.float32)
        o_ref[...] = (y + b2_ref[...]).astype(o_ref.dtype)

    def streamed_kernel(x_ref, w1_ref, b1_ref, w2_ref, b2_ref, o_ref, acc_ref):
        # k-tiled reduction over the intermediate dim.
        k = pl.program_id(1)

        @pl.when(k == 0)
        def _():
            # Seed accumulator with b2 so the epilogue is only a cast.
            acc_ref[...] = jnp.broadcast_to(b2_ref[...], acc_ref.shape)

        h = jnp.dot(x_ref[...], w1_ref[...], preferred_element_type=jnp.float32)
        h = gelu(h + b1_ref[...])
        acc_ref[...] += jnp.dot(h.astype(w2_ref.dtype), w2_ref[...],
                                preferred_element_type=jnp.float32)

        @pl.when(k == pl.num_programs(1) - 1)
        def _():
            o_ref[...] = acc_ref[...].astype(o_ref.dtype)

    return resident_kernel, streamed_kernel


def feed_forward(x, w1, b1, w2, b2, *, compute_dtype=jnp.bfloat16,
                 tm=None, tk=None, force_streamed=False, approx_gelu=False):
    """x: [B, S, H].  w1: [H, I] (pre-transposed), b1: [I], w2: [I, H], b2: [H].
    Weights may also be pre-padded/cast via prepare_weights() (zero-copy)."""
    B, S, H = x.shape
    Hw, I = w1.shape
    assert Hw >= H and w2.shape == (I, Hw)
    M = B * S

    Hp = _round_up(Hw, 128)
    Ip = _round_up(I, 128)
    cd = compute_dtype
    isz = jnp.dtype(cd).itemsize
    osz = jnp.dtype(x.dtype).itemsize

    # --- per-generation VMEM budget (leave headroom for Mosaic scratch) ----
    vmem_cap = _tpu_vmem_capacity()
    budget = max(32 << 20, min(int(vmem_cap * 0.8), vmem_cap - (8 << 20)))
    small_vmem = vmem_cap <= (64 << 20) + (1 << 20)  # v7x-class (64 MiB / TC)

    w_bytes = 2 * Hp * Ip * isz  # W1 + W2, padded, compute dtype

    def resident_bytes(t):
        return (2 * w_bytes                  # W1+W2 (conservative: 2 buffers)
                + 2 * t * Hp * isz           # x tile (double-buffered)
                + 2 * t * Hp * osz           # output tile
                + 2 * (Ip + Hp) * 4          # biases (f32)
                + t * Ip * (4 + isz))        # matmul-1 f32 result + cast

    def streamed_bytes(t, k):
        return (2 * t * Hp * isz             # x tile
                + 2 * Hp * k * isz           # W1 sliver
                + 2 * k * Hp * isz           # W2 sliver
                + 2 * (k + Hp) * 4           # biases
                + 2 * t * Hp * osz           # output tile
                + t * Hp * 4                 # f32 accumulator scratch
                + t * k * (4 + isz))         # matmul-1 intermediate

    m16 = _round_up(M, 16)  # bf16 sublane packing

    # --- resident-weight plan ----------------------------------------------
    tm_r = min(tm if tm is not None else 512, m16)
    while tm_r > 16 and resident_bytes(tm_r) > budget:
        tm_r = max(16, _round_up(tm_r // 2, 16))
    resident_ok = (not force_streamed
                   and resident_bytes(tm_r) <= budget
                   and tm_r >= min(128, m16))

    # --- streamed (k-tiled) plan -------------------------------------------
    if tk is not None:
        tk_s = tk
    else:
        tk_s = 512 if Hp <= 2048 else 256
        while tk_s > 128 and Ip % tk_s != 0:
            tk_s //= 2
    tk_s = min(tk_s, Ip)
    assert Ip % tk_s == 0
    # Arithmetic-intensity targets: ~768 rows (v5e/v6e), ~512 rows (v7x).
    tm_s = min(tm if tm is not None else (512 if small_vmem else 768), m16)
    while streamed_bytes(tm_s, tk_s) > budget:
        if tk_s > 128:
            tk_s //= 2
        elif tm_s > 16:
            tm_s = max(16, _round_up(tm_s // 2, 16))
        else:
            break

    if resident_ok or Ip // tk_s == 1:
        path = "resident"
        tm_sel = tm_r if resident_ok else tm_s
    else:
        path = "streamed"
        tm_sel = tm_s

    # Prefer >=2 row tiles so the 'parallel' axis can feed both TCs (megacore).
    if M > 256 and _cdiv(M, tm_sel) < 2:
        tm_sel = _round_up(_cdiv(M, 2), 16)

    Mp = _cdiv(M, tm_sel) * tm_sel
    n_row = Mp // tm_sel

    # --- operands (padding skipped when already aligned / prepared) --------
    x2 = _pad2(x.reshape(M, H), Mp, Hp, cd)
    w1p = _pad2(w1, Hp, Ip, cd)
    w2p = _pad2(w2, Ip, Hp, cd)
    b1p = _pad2(b1.reshape(1, -1), 1, Ip, jnp.float32)
    b2p = _pad2(b2.reshape(1, -1), 1, Hp, jnp.float32)

    # --- cost estimate (weights re-streamed per row tile in k-tiled path) --
    flops = 4 * M * H * I
    trans = M * I
    if path == "resident":
        bytes_accessed = Mp * Hp * isz + w_bytes + (Ip + Hp) * 4 + Mp * Hp * osz
        needed = resident_bytes(tm_sel)
    else:
        bytes_accessed = (Mp * Hp * isz + n_row * (w_bytes + (Ip + Hp) * 4)
                          + Mp * Hp * osz)
        needed = streamed_bytes(tm_sel, tk_s)
    cost = pl.CostEstimate(flops=int(flops), transcendentals=int(trans),
                           bytes_accessed=int(bytes_accessed))
    vmem_limit = int(min(budget, max(needed + (4 << 20), 32 << 20)))

    resident_kernel, streamed_kernel = _make_kernels(
        _gelu_tanh if approx_gelu else _gelu_exact)

    if path == "resident":
        grid_spec = pltpu.PrefetchScalarGridSpec(
            num_scalar_prefetch=0,
            grid=(n_row,),
            in_specs=[
                pl.BlockSpec((tm_sel, Hp), lambda i: (i, 0)),   # x rows
                pl.BlockSpec((Hp, Ip), lambda i: (0, 0)),       # W1 (resident)
                pl.BlockSpec((1, Ip), lambda i: (0, 0)),        # b1
                pl.BlockSpec((Ip, Hp), lambda i: (0, 0)),       # W2 (resident)
                pl.BlockSpec((1, Hp), lambda i: (0, 0)),        # b2
            ],
            out_specs=pl.BlockSpec((tm_sel, Hp), lambda i: (i, 0)),
        )
        kernel = resident_kernel
        dims = ("parallel",)
    else:
        grid_spec = pltpu.PrefetchScalarGridSpec(
            num_scalar_prefetch=0,
            grid=(n_row, Ip // tk_s),
            in_specs=[
                pl.BlockSpec((tm_sel, Hp), lambda i, k: (i, 0)),  # x rows
                pl.BlockSpec((Hp, tk_s), lambda i, k: (0, k)),    # W1 sliver
                pl.BlockSpec((1, tk_s), lambda i, k: (0, k)),     # b1 sliver
                pl.BlockSpec((tk_s, Hp), lambda i, k: (k, 0)),    # W2 sliver
                pl.BlockSpec((1, Hp), lambda i, k: (0, 0)),       # b2
            ],
            out_specs=pl.BlockSpec((tm_sel, Hp), lambda i, k: (i, 0)),
            scratch_shapes=[pltpu.VMEM((tm_sel, Hp), jnp.float32)],
        )
        kernel = streamed_kernel
        dims = ("parallel", "arbitrary")

    out = pl.pallas_call(
        kernel,
        out_shape=jax.ShapeDtypeStruct((Mp, Hp), x.dtype),
        grid_spec=grid_spec,
        compiler_params=pltpu.CompilerParams(
            dimension_semantics=dims,
            vmem_limit_bytes=vmem_limit,
        ),
        cost_estimate=cost,
    )(x2, w1p, b1p, w2p, b2p)

    return out[:M, :H].reshape(B, S, H)


def reference(x, w1, b1, w2, b2, compute_dtype=jnp.bfloat16):
    """Mirror of the kernel math (bf16 operands, f32 accumulation, exact GELU)."""
    B, S, H = x.shape
    xf = x.reshape(-1, H).astype(compute_dtype).astype(jnp.float32)
    w1f = w1.astype(compute_dtype).astype(jnp.float32)
    w2f = w2.astype(compute_dtype).astype(jnp.float32)
    h = jnp.dot(xf, w1f) + b1.astype(jnp.float32)
    h = _gelu_exact(h)
    h = h.astype(compute_dtype).astype(jnp.float32)
    y = jnp.dot(h, w2f) + b2.astype(jnp.float32)
    return y.reshape(B, S, H).astype(x.dtype)


if __name__ == "__main__":
    keys = jax.random.split(jax.random.PRNGKey(0), 10)

    # ---- Test 1: small BERT-like config -> weight-resident path -----------
    B, S, H = 2, 8, 32
    I = 4 * H
    x = jax.random.normal(keys[0], (B, S, H), dtype=jnp.float32)
    w1 = jax.random.normal(keys[1], (H, I), dtype=jnp.float32) * (1.0 / math.sqrt(H))
    b1 = jax.random.normal(keys[2], (I,), dtype=jnp.float32) * 0.02
    w2 = jax.random.normal(keys[3], (I, H), dtype=jnp.float32) * (1.0 / math.sqrt(I))
    b2 = jax.random.normal(keys[4], (H,), dtype=jnp.float32) * 0.02

    # Prepare (pad/cast) weights once, outside the hot path.
    w1p, b1p, w2p, b2p = prepare_weights(w1, b1, w2, b2)
    y = jax.block_until_ready(feed_forward(x, w1p, b1p, w2p, b2p))
    y_ref = reference(x, w1, b1, w2, b2)
    assert y.shape == (B, S, H)
    assert jnp.allclose(y, y_ref, atol=1e-2, rtol=1e-2), "resident path mismatch"

    # ---- Test 2: forced streamed path (multi row tiles + multi k steps) ----
    B2, S2, H2 = 2, 25, 64
    I2 = 4 * H2
    x2 = jax.random.normal(keys[5], (B2, S2, H2), dtype=jnp.float32)
    w1b = jax.random.normal(keys[6], (H2, I2), dtype=jnp.float32) * (1.0 / math.sqrt(H2))
    b1b = jax.random.normal(keys[7], (I2,), dtype=jnp.float32) * 0.02
    w2b = jax.random.normal(keys[8], (I2, H2), dtype=jnp.float32) * (1.0 / math.sqrt(I2))
    b2b = jax.random.normal(keys[9], (H2,), dtype=jnp.float32) * 0.02

    y2 = jax.block_until_ready(
        feed_forward(x2, w1b, b1b, w2b, b2b, tm=16, tk=128, force_streamed=True))
    y2_ref = reference(x2, w1b, b1b, w2b, b2b)
    assert y2.shape == (B2, S2, H2)
    assert jnp.allclose(y2, y2_ref, atol=1e-2, rtol=1e-2), "streamed path mismatch"

    print("KERNEL_OK")
</pallas_src>

<mosaic_0001>
module attributes {stable_mosaic.version = 11 : i64} {
  func.func @resident_kernel(%arg0: i32, %arg1: memref<16x128xbf16, #tpu.memory_space<vmem>>, %arg2: memref<128x128xbf16, #tpu.memory_space<vmem>>, %arg3: memref<1x128xf32, #tpu.memory_space<vmem>>, %arg4: memref<128x128xbf16, #tpu.memory_space<vmem>>, %arg5: memref<1x128xf32, #tpu.memory_space<vmem>>, %arg6: memref<16x128xf32, #tpu.memory_space<vmem>>) attributes {dimension_semantics = [#tpu.dimension_semantics<parallel>], iteration_bounds = array<i64: 1>, scalar_prefetch = 0 : i64, scratch_operands = 0 : i64, tpu.core_type = #tpu.core_type<tc>, window_params = [{transform_indices = @transform_0, window_bounds = array<i64: 16, 128>}, {pipeline_mode = #tpu.pipeline_mode<synchronous>, transform_indices = @transform_1, window_bounds = array<i64: 128, 128>}, {pipeline_mode = #tpu.pipeline_mode<synchronous>, transform_indices = @transform_2, window_bounds = array<i64: 1, 128>}, {pipeline_mode = #tpu.pipeline_mode<synchronous>, transform_indices = @transform_3, window_bounds = array<i64: 128, 128>}, {pipeline_mode = #tpu.pipeline_mode<synchronous>, transform_indices = @transform_4, window_bounds = array<i64: 1, 128>}, {transform_indices = @transform_5, window_bounds = array<i64: 16, 128>}]} {
    %c0 = arith.constant 0 : index
    %c0_0 = arith.constant 0 : index
    %0 = vector.load %arg1[%c0, %c0_0] : memref<16x128xbf16, #tpu.memory_space<vmem>>, vector<16x128xbf16>
    %c0_1 = arith.constant 0 : index
    %c0_2 = arith.constant 0 : index
    %1 = vector.load %arg2[%c0_1, %c0_2] : memref<128x128xbf16, #tpu.memory_space<vmem>>, vector<128x128xbf16>
    %cst = arith.constant dense<0.000000e+00> : vector<16x128xf32>
    %2 = tpu.matmul %0, %1, %cst {dimension_numbers = #tpu.dot_dimension_numbers<[1], [0], [0], [1], [0, 0, 1, 1], [], []>} : vector<16x128xbf16>, vector<128x128xbf16>, vector<16x128xf32> -> vector<16x128xf32>
    %c0_3 = arith.constant 0 : index
    %c0_4 = arith.constant 0 : index
    %3 = vector.load %arg3[%c0_3, %c0_4] : memref<1x128xf32, #tpu.memory_space<vmem>>, vector<1x128xf32>
    %4 = vector.broadcast %3 : vector<1x128xf32> to vector<16x128xf32>
    %5 = arith.addf %2, %4 : vector<16x128xf32>
    %cst_5 = arith.constant 5.000000e-01 : f32
    %6 = vector.broadcast %cst_5 : f32 to vector<16x128xf32>
    %7 = arith.mulf %6, %5 : vector<16x128xf32>
    %cst_6 = arith.constant 0.707106769 : f32
    %8 = vector.broadcast %cst_6 : f32 to vector<16x128xf32>
    %9 = arith.mulf %5, %8 : vector<16x128xf32>
    %10 = math.erf %9 : vector<16x128xf32>
    %cst_7 = arith.constant 1.000000e+00 : f32
    %11 = vector.broadcast %cst_7 : f32 to vector<16x128xf32>
    %12 = arith.addf %11, %10 : vector<16x128xf32>
    %13 = arith.mulf %7, %12 : vector<16x128xf32>
    %14 = arith.truncf %13 : vector<16x128xf32> to vector<16x128xbf16>
    %c0_8 = arith.constant 0 : index
    %c0_9 = arith.constant 0 : index
    %15 = vector.load %arg4[%c0_8, %c0_9] : memref<128x128xbf16, #tpu.memory_space<vmem>>, vector<128x128xbf16>
    %cst_10 = arith.constant dense<0.000000e+00> : vector<16x128xf32>
    %16 = tpu.matmul %14, %15, %cst_10 {dimension_numbers = #tpu.dot_dimension_numbers<[1], [0], [0], [1], [0, 0, 1, 1], [], []>} : vector<16x128xbf16>, vector<128x128xbf16>, vector<16x128xf32> -> vector<16x128xf32>
    %c0_11 = arith.constant 0 : index
    %c0_12 = arith.constant 0 : index
    %17 = vector.load %arg5[%c0_11, %c0_12] : memref<1x128xf32, #tpu.memory_space<vmem>>, vector<1x128xf32>
    %18 = vector.broadcast %17 : vector<1x128xf32> to vector<16x128xf32>
    %19 = arith.addf %16, %18 : vector<16x128xf32>
    %c0_13 = arith.constant 0 : index
    %c0_14 = arith.constant 0 : index
    %20 = vector.load %arg6[%c0_13, %c0_14] : memref<16x128xf32, #tpu.memory_space<vmem>>, vector<16x128xf32>
    tpu.vector_store %arg6[%c0_13, %c0_14], %19 {strides = array<i32>} : memref<16x128xf32, #tpu.memory_space<vmem>>, vector<16x128xf32>,
    return
  }
  func.func @transform_0(%arg0: i32) -> (i32, i32) {
    %c0_i32 = arith.constant 0 : i32
    %c0_i32_0 = arith.constant 0 : i32
    return %arg0, %c0_i32 : i32, i32
  }
  func.func @transform_1(%arg0: i32) -> (i32, i32) {
    %c0_i32 = arith.constant 0 : i32
    %c0_i32_0 = arith.constant 0 : i32
    %c0_i32_1 = arith.constant 0 : i32
    return %c0_i32, %c0_i32_0 : i32, i32
  }
  func.func @transform_2(%arg0: i32) -> (i32, i32) {
    %c0_i32 = arith.constant 0 : i32
    %c0_i32_0 = arith.constant 0 : i32
    %c0_i32_1 = arith.constant 0 : i32
    return %c0_i32, %c0_i32_0 : i32, i32
  }
  func.func @transform_3(%arg0: i32) -> (i32, i32) {
    %c0_i32 = arith.constant 0 : i32
    %c0_i32_0 = arith.constant 0 : i32
    %c0_i32_1 = arith.constant 0 : i32
    return %c0_i32, %c0_i32_0 : i32, i32
  }
  func.func @transform_4(%arg0: i32) -> (i32, i32) {
    %c0_i32 = arith.constant 0 : i32
    %c0_i32_0 = arith.constant 0 : i32
    %c0_i32_1 = arith.constant 0 : i32
    return %c0_i32, %c0_i32_0 : i32, i32
  }
  func.func @transform_5(%arg0: i32) -> (i32, i32) {
    %c0_i32 = arith.constant 0 : i32
    %c0_i32_0 = arith.constant 0 : i32
    return %arg0, %c0_i32 : i32, i32
  }
}

</mosaic_0001>

<llo_original>
// kernel: tpu_custom_call.1
$region0: #{tpu_custom_call.1}
  #allocation0 [shape = 'u32[]', space=smem, size = 0x4, offset = 0x4, fixed_abs, tag = 'smem constant byte address 0x4 - core index']
  #allocation1 [shape = 'u32[144,128]{1,0:T(1,128)}', space=vmem, size = 0x12000, scoped, tag = 'internal scratch']
  %s0 = inlined_call_operand.hbm [shape: bf16[16,128], index: 0, kind: input, shape index: {}]
  %s1 = inlined_call_operand.hbm [shape: bf16[128,128], index: 1, kind: input, shape index: {}]
  %s2 = inlined_call_operand.vmem [shape: f32[1,128], index: 2, kind: input, shape index: {}]
  %s3 = inlined_call_operand.hbm [shape: bf16[128,128], index: 3, kind: input, shape index: {}]
  %s4 = inlined_call_operand.vmem [shape: f32[1,128], index: 4, kind: input, shape index: {}]
  %s5 = inlined_call_operand.hbm [shape: f32[16,128], index: 5, kind: output, shape index: {}]
  %s6 = sld [smem:[#allocation0]]
  $region42: #{tpu_custom_call.1} parent=0
    _
  %s8 = ssub.s32 1, %s6
  %s9 = scalar_select 0, %s8, %s6
  $region1: #{tpu_custom_call.1} parent=0
    #allocation2 [shape = 'u8[4096]{0}', space=vmem, size = 0x1000, scoped, tag = 'input window, operand 0, single buffered']
    #allocation3 [shape = 's32[1]{0}', space=sflag, size = 0x4, scoped, tag = 'scoped memory for tpu_custom_call.1']
    #allocation4 [shape = 's32[1]{0}', space=sflag, size = 0x4, scoped, tag = 'scoped memory for tpu_custom_call.1']
    #allocation5 [shape = 'u8[32768]{0}', space=vmem, size = 0x8000, scoped, tag = 'input window, operand 1, single buffered']
    #allocation6 [shape = 's32[1]{0}', space=sflag, size = 0x4, scoped, tag = 'scoped memory for tpu_custom_call.1']
    #allocation7 [shape = 'u8[32768]{0}', space=vmem, size = 0x8000, scoped, tag = 'input window, operand 3, single buffered']
    #allocation8 [shape = 'u8[8192]{0}', space=vmem, size = 0x2000, scoped, tag = 'output window, operand 0, single buffered']
    %10 = vsyncpa [#allocation3], 0
    %11 = vsyncpa [#allocation6], 0
    %12 = vsyncpa [#allocation4], 0
    // Predicated region
    $region2: #{tpu_custom_call.1} parent=1 // pred_check
      _
    $region3: #{tpu_custom_call.1} parent=1 // pred_check_branch
      %14 = sbr.rel (0) target = $region5
    $region4: #{tpu_custom_call.1} parent=1 // pred_region
      %s16 = ssub.s32 128, 128
      %17 = vsyncadd [#allocation3], %s16
      %s18 = sshll.u32 [#allocation2], 4
      %s19 = int_to_ptr.vmem [resolvable:$true] %s18
      %24 = dma.hbm_to_vmem [thread:$0]  %s0, 128, %s19, [#allocation3], 64, 64, 4
    $region5: #{tpu_custom_call.1} parent=1 // pred_fallthru
      _
    // Predicated region
    $region6: #{tpu_custom_call.1} parent=1 // pred_check
      _
    $region7: #{tpu_custom_call.1} parent=1 // pred_check_branch
      %26 = sbr.rel (0) target = $region9
    $region8: #{tpu_custom_call.1} parent=1 // pred_region
      %s28 = ssub.s32 1024, 1024
      %29 = vsyncadd [#allocation6], %s28
      %s30 = sshll.u32 [#allocation5], 4
      %s31 = int_to_ptr.vmem [resolvable:$true] %s30
      %36 = dma.hbm_to_vmem [thread:$0]  %s1, 1024, %s31, [#allocation6], 64, 64, 4
    $region9: #{tpu_custom_call.1} parent=1 // pred_fallthru
      _
    // Predicated region
    $region10: #{tpu_custom_call.1} parent=1 // pred_check
      _
    $region11: #{tpu_custom_call.1} parent=1 // pred_check_branch
      %38 = sbr.rel (0) target = $region13
    $region12: #{tpu_custom_call.1} parent=1 // pred_region
      _
    $region13: #{tpu_custom_call.1} parent=1 // pred_fallthru
      _
    // Predicated region
    $region14: #{tpu_custom_call.1} parent=1 // pred_check
      _
    $region15: #{tpu_custom_call.1} parent=1 // pred_check_branch
      %40 = sbr.rel (0) target = $region17
    $region16: #{tpu_custom_call.1} parent=1 // pred_region
      %s42 = ssub.s32 1024, 1024
      %43 = vsyncadd [#allocation6], %s42
      %s44 = sshll.u32 [#allocation7], 4
      %s45 = int_to_ptr.vmem [resolvable:$true] %s44
      %50 = dma.hbm_to_vmem [thread:$0]  %s3, 1024, %s45, [#allocation6], 64, 64, 4
    $region17: #{tpu_custom_call.1} parent=1 // pred_fallthru
      _
    // Predicated region
    $region18: #{tpu_custom_call.1} parent=1 // pred_check
      _
    $region19: #{tpu_custom_call.1} parent=1 // pred_check_branch
      %52 = sbr.rel (0) target = $region21
    $region20: #{tpu_custom_call.1} parent=1 // pred_region
      _
    $region21: #{tpu_custom_call.1} parent=1 // pred_fallthru
      _
    // Predicated region
    $region22: #{tpu_custom_call.1} parent=1 // pred_check
      _
    $region23: #{tpu_custom_call.1} parent=1 // pred_check_branch
      %54 = sbr.rel (0) target = $region25
    $region24: #{tpu_custom_call.1} parent=1 // pred_region
      %55 = dma.done [#allocation3], 128
    $region25: #{tpu_custom_call.1} parent=1 // pred_fallthru
      _
    // Predicated region
    $region26: #{tpu_custom_call.1} parent=1 // pred_check
      _
    $region27: #{tpu_custom_call.1} parent=1 // pred_check_branch
      %57 = sbr.rel (0) target = $region29
    $region28: #{tpu_custom_call.1} parent=1 // pred_region
      %58 = dma.done [#allocation6], 1024
    $region29: #{tpu_custom_call.1} parent=1 // pred_fallthru
      _
    // Predicated region
    $region30: #{tpu_custom_call.1} parent=1 // pred_check
      _
    $region31: #{tpu_custom_call.1} parent=1 // pred_check_branch
      %60 = sbr.rel (0) target = $region33
    $region32: #{tpu_custom_call.1} parent=1 // pred_region
      %61 = dma.done [#allocation6], 1024
    $region33: #{tpu_custom_call.1} parent=1 // pred_fallthru
      _
    %v63 = vld [vmem:[#allocation2] sm:$0xf]
    %v64 = vld [vmem:[#allocation2 + $0x4] sm:$0xf]
    %v65 = vld [vmem:[#allocation5] sm:$0xf]
    %v66 = vld [vmem:[#allocation5 + $0x4] sm:$0xf]
    %v67 = vld [vmem:[#allocation5 + $0x8] sm:$0xf]
    %v68 = vld [vmem:[#allocation5 + $0xc] sm:$0xf]
    %v69 = vld [vmem:[#allocation5 + $0x10] sm:$0xf]
    %v70 = vld [vmem:[#allocation5 + $0x14] sm:$0xf]
    %v71 = vld [vmem:[#allocation5 + $0x18] sm:$0xf]
    %v72 = vld [vmem:[#allocation5 + $0x1c] sm:$0xf]
    %v73 = vld [vmem:[#allocation5 + $0x20] sm:$0xf]
    %v74 = vld [vmem:[#allocation5 + $0x24] sm:$0xf]
    %v75 = vld [vmem:[#allocation5 + $0x28] sm:$0xf]
    %v76 = vld [vmem:[#allocation5 + $0x2c] sm:$0xf]
    %v77 = vld [vmem:[#allocation5 + $0x30] sm:$0xf]
    %v78 = vld [vmem:[#allocation5 + $0x34] sm:$0xf]
    %v79 = vld [vmem:[#allocation5 + $0x38] sm:$0xf]
    %v80 = vld [vmem:[#allocation5 + $0x3c] sm:$0xf]
    %v81 = vld [vmem:[%s2] sm:$0x1]
    %v83 = vlaneseq
    %v84 = vshrl.u32 %v83, 7
    %v85 = vsub.s32 0, %v84
    %v86 = vrot.slane %v81, %v85
    %v90 = vunpack.c.l.b16 %v63
    %v91 = vunpack.c.l.b16 %v64
    %v92 = vpack.c.b16 %v91, %v90
    %v110 = vunpack.c.l.b16 %v65
    %v111 = vunpack.c.l.b16 %v66
    %v112 = vunpack.c.l.b16 %v67
    %v113 = vunpack.c.l.b16 %v68
    %v114 = vunpack.c.l.b16 %v69
    %v115 = vunpack.c.l.b16 %v70
    %v116 = vunpack.c.l.b16 %v71
    %v117 = vunpack.c.l.b16 %v72
    %v118 = vunpack.c.l.b16 %v73
    %v119 = vunpack.c.l.b16 %v74
    %v120 = vunpack.c.l.b16 %v75
    %v121 = vunpack.c.l.b16 %v76
    %v122 = vunpack.c.l.b16 %v77
    %v123 = vunpack.c.l.b16 %v78
    %v124 = vunpack.c.l.b16 %v79
    %v125 = vunpack.c.l.b16 %v80
    %v126 = vpack.c.b16 %v111, %v110
    %v127 = vpack.c.b16 %v113, %v112
    %v128 = vpack.c.b16 %v115, %v114
    %v129 = vpack.c.b16 %v117, %v116
    %v130 = vpack.c.b16 %v119, %v118
    %v131 = vpack.c.b16 %v121, %v120
    %v132 = vpack.c.b16 %v123, %v122
    %v133 = vpack.c.b16 %v125, %v124
    %142 = vmatprep.subr.bf16.mxu0 0
    %143 = vmatpush1.bf16.msra.mxu0 %v126
    %144 = vmatprep.subr.bf16.mxu0 0
    %145 = vmatpush1.bf16.msra.mxu0 %v127
    %146 = vmatprep.subr.bf16.mxu0 0
    %147 = vmatpush1.bf16.msra.mxu0 %v128
    %148 = vmatprep.subr.bf16.mxu0 0
    %149 = vmatpush1.bf16.msra.mxu0 %v129
    %150 = vmatprep.subr.bf16.mxu0 0
    %151 = vmatpush1.bf16.msra.mxu0 %v130
    %152 = vmatprep.subr.bf16.mxu0 0
    %153 = vmatpush1.bf16.msra.mxu0 %v131
    %154 = vmatprep.subr.bf16.mxu0 0
    %155 = vmatpush1.bf16.msra.mxu0 %v132
    %156 = vmatprep.subr.bf16.mxu0 0
    %157 = vmatpush1.bf16.msra.mxu0 %v133
    %158 = vmatprep.subr.bf16.mxu0 0
    %159 = vmatpush1.bf16.msra.mxu0 0
    %160 = vmatprep.subr.bf16.mxu0 0
    %161 = vmatpush1.bf16.msra.mxu0 0
    %162 = vmatprep.subr.bf16.mxu0 0
    %163 = vmatpush1.bf16.msra.mxu0 0
    %164 = vmatprep.subr.bf16.mxu0 0
    %165 = vmatpush1.bf16.msra.mxu0 0
    %166 = vmatprep.subr.bf16.mxu0 0
    %167 = vmatpush1.bf16.msra.mxu0 0
    %168 = vmatprep.subr.bf16.mxu0 0
    %169 = vmatpush1.bf16.msra.mxu0 0
    %170 = vmatprep.subr.bf16.mxu0 0
    %171 = vmatpush1.bf16.msra.mxu0 0
    %172 = vmatprep.subr.bf16.mxu0 0
    %173 = vmatpush1.bf16.msra.mxu0 0
    %174 = vmatprep.mubr.bf16.mxu0 0
    %175 = vmatmul.mubr.bf16.gmra.mrb[0].mxu0 %v92
    %v176 = vpop.f32.mrb[0].mxu0
    %v177 = vadd.f32 %v86, %v176
    %v178 = vpop.f32.mrb[0].mxu0
    %v179 = vpop.f32.mrb[0].mxu0
    %v180 = vadd.f32 %v86, %v179
    %v181 = vpop.f32.mrb[0].mxu0
    %182 = vdwg.mxu0
    %v183 = vmul.f32 %v177, 0.5
    %v184 = vmul.f32 %v180, 0.5
    %v185 = vmul.f32 %v177, 0.70710677
    %v186 = vmul.f32 %v180, 0.70710677
    %v187 = verf.f32.pop %v185
    %v188 = verf.f32.pop %v186
    %v189 = vadd.f32 %v187, 1.0
    %v190 = vadd.f32 %v188, 1.0
    %v191 = vmul.f32 %v183, %v189
    %v192 = vmul.f32 %v184, %v190
    %v193 = vpack.c.bf16 %v192, %v191
    %v194 = vld [vmem:[#allocation7] sm:$0xf]
    %v195 = vld [vmem:[#allocation7 + $0x4] sm:$0xf]
    %v196 = vld [vmem:[#allocation7 + $0x8] sm:$0xf]
    %v197 = vld [vmem:[#allocation7 + $0xc] sm:$0xf]
    %v198 = vld [vmem:[#allocation7 + $0x10] sm:$0xf]
    %v199 = vld [vmem:[#allocation7 + $0x14] sm:$0xf]
    %v200 = vld [vmem:[#allocation7 + $0x18] sm:$0xf]
    %v201 = vld [vmem:[#allocation7 + $0x1c] sm:$0xf]
    %v202 = vld [vmem:[#allocation7 + $0x20] sm:$0xf]
    %v203 = vld [vmem:[#allocation7 + $0x24] sm:$0xf]
    %v204 = vld [vmem:[#allocation7 + $0x28] sm:$0xf]
    %v205 = vld [vmem:[#allocation7 + $0x2c] sm:$0xf]
    %v206 = vld [vmem:[#allocation7 + $0x30] sm:$0xf]
    %v207 = vld [vmem:[#allocation7 + $0x34] sm:$0xf]
    %v208 = vld [vmem:[#allocation7 + $0x38] sm:$0xf]
    %v209 = vld [vmem:[#allocation7 + $0x3c] sm:$0xf]
    %v210 = vld [vmem:[%s4] sm:$0x1]
    %v212 = vlaneseq
    %v213 = vshrl.u32 %v212, 7
    %v214 = vsub.s32 0, %v213
    %v215 = vrot.slane %v210, %v214
    %v233 = vunpack.c.l.b16 %v194
    %v234 = vunpack.c.l.b16 %v195
    %v235 = vunpack.c.l.b16 %v196
    %v236 = vunpack.c.l.b16 %v197
    %v237 = vunpack.c.l.b16 %v198
    %v238 = vunpack.c.l.b16 %v199
    %v239 = vunpack.c.l.b16 %v200
    %v240 = vunpack.c.l.b16 %v201
    %v241 = vunpack.c.l.b16 %v202
    %v242 = vunpack.c.l.b16 %v203
    %v243 = vunpack.c.l.b16 %v204
    %v244 = vunpack.c.l.b16 %v205
    %v245 = vunpack.c.l.b16 %v206
    %v246 = vunpack.c.l.b16 %v207
    %v247 = vunpack.c.l.b16 %v208
    %v248 = vunpack.c.l.b16 %v209
    %v249 = vpack.c.b16 %v234, %v233
    %v250 = vpack.c.b16 %v236, %v235
    %v251 = vpack.c.b16 %v238, %v237
    %v252 = vpack.c.b16 %v240, %v239
    %v253 = vpack.c.b16 %v242, %v241
    %v254 = vpack.c.b16 %v244, %v243
    %v255 = vpack.c.b16 %v246, %v245
    %v256 = vpack.c.b16 %v248, %v247
    %265 = vmatprep.subr.bf16.mxu0 0
    %266 = vmatpush1.bf16.msra.mxu0 %v249
    %267 = vmatprep.subr.bf16.mxu0 0
    %268 = vmatpush1.bf16.msra.mxu0 %v250
    %269 = vmatprep.subr.bf16.mxu0 0
    %270 = vmatpush1.bf16.msra.mxu0 %v251
    %271 = vmatprep.subr.bf16.mxu0 0
    %272 = vmatpush1.bf16.msra.mxu0 %v252
    %273 = vmatprep.subr.bf16.mxu0 0
    %274 = vmatpush1.bf16.msra.mxu0 %v253
    %275 = vmatprep.subr.bf16.mxu0 0
    %276 = vmatpush1.bf16.msra.mxu0 %v254
    %277 = vmatprep.subr.bf16.mxu0 0
    %278 = vmatpush1.bf16.msra.mxu0 %v255
    %279 = vmatprep.subr.bf16.mxu0 0
    %280 = vmatpush1.bf16.msra.mxu0 %v256
    %281 = vmatprep.subr.bf16.mxu0 0
    %282 = vmatpush1.bf16.msra.mxu0 0
    %283 = vmatprep.subr.bf16.mxu0 0
    %284 = vmatpush1.bf16.msra.mxu0 0
    %285 = vmatprep.subr.bf16.mxu0 0
    %286 = vmatpush1.bf16.msra.mxu0 0
    %287 = vmatprep.subr.bf16.mxu0 0
    %288 = vmatpush1.bf16.msra.mxu0 0
    %289 = vmatprep.subr.bf16.mxu0 0
    %290 = vmatpush1.bf16.msra.mxu0 0
    %291 = vmatprep.subr.bf16.mxu0 0
    %292 = vmatpush1.bf16.msra.mxu0 0
    %293 = vmatprep.subr.bf16.mxu0 0
    %294 = vmatpush1.bf16.msra.mxu0 0
    %295 = vmatprep.subr.bf16.mxu0 0
    %296 = vmatpush1.bf16.msra.mxu0 0
    %297 = vmatprep.mubr.bf16.mxu0 0
    %298 = vmatmul.mubr.bf16.gmra.mrb[0].mxu0 %v193
    %v299 = vpop.f32.mrb[0].mxu0
    %v300 = vadd.f32 %v215, %v299
    %v301 = vpop.f32.mrb[0].mxu0
    %v302 = vpop.f32.mrb[0].mxu0
    %v303 = vadd.f32 %v215, %v302
    %v304 = vpop.f32.mrb[0].mxu0
    %305 = vdwg.mxu0
    %306 = vst [vmem:[#allocation8] sm:$0xff] %v300
    %307 = vst [vmem:[#allocation8 + $0x8] sm:$0xff] %v303
    // Predicated region
    $region34: #{tpu_custom_call.1} parent=1 // pred_check
      _
    $region35: #{tpu_custom_call.1} parent=1 // pred_check_branch
      %309 = sbr.rel (0) target = $region37
    $region36: #{tpu_custom_call.1} parent=1 // pred_region
      %s311 = ssub.s32 256, 256
      %312 = vsyncadd [#allocation4], %s311
      %s313 = sshll.u32 [#allocation8], 4
      %s314 = int_to_ptr.vmem [resolvable:$true] %s313
      %319 = dma.vmem_to_hbm [thread:$0]  %s314, 256, %s5, [#allocation4], 128, 128, 8
    $region37: #{tpu_custom_call.1} parent=1 // pred_fallthru
      _
    // Predicated region
    $region38: #{tpu_custom_call.1} parent=1 // pred_check
      _
    $region39: #{tpu_custom_call.1} parent=1 // pred_check_branch
      %321 = sbr.rel (0) target = $region41
    $region40: #{tpu_custom_call.1} parent=1 // pred_region
      %322 = dma.done [#allocation4], 256
    $region41: #{tpu_custom_call.1} parent=1 // pred_fallthru
      _
    %323 = vsyncpa [#allocation3], 1
    %324 = vsyncpa [#allocation6], 1
    %325 = vsyncpa [#allocation4], 1

</llo_original>
